<compile_context>
chip_gen: v6e
topology: v6e:2x2x1
jax: 0.10.0
libtpu: 0.0.40
codegen_flags: <defaults>
</compile_context>

<pallas_src>
import functools
import warnings

import jax
import jax.numpy as jnp
from jax.experimental import pallas as pl
from jax.experimental.pallas import tpu as pltpu


# ----------------------------- small helpers --------------------------------

def _round_up(a: int, b: int) -> int:
    return (a + b - 1) // b * b


def _cdiv(a: int, b: int) -> int:
    return (a + b - 1) // b


def _pad2(a, shape, dtype):
    out = jnp.zeros(shape, dtype)
    return out.at[: a.shape[0], : a.shape[1]].set(a.astype(dtype))


def _vmem_budget_bytes() -> int:
    """Per-generation VMEM budget with ~20% headroom for compiler scratch."""
    cap = None
    try:
        info = pltpu.get_tpu_info()
        cap = getattr(info, "vmem_capacity_bytes", None)
    except Exception:
        cap = None
    if not cap:
        cap = 64 * 1024 * 1024  # conservative default (v7x per-TC VMEM)
    return int(cap * 0.8)


def _num_tensorcores() -> int:
    """TensorCores per device (v4/v5p megacore, v7x: 2; v5e/v6e: 1)."""
    try:
        kind = jax.devices()[0].device_kind.lower()
    except Exception:
        return 1
    for tag in ("v4", "v5p", "v7"):
        if tag in kind:
            return 2
    return 1


_SINGLE_BUFFER_OK = None  # decided once, cached


def _single_buffer_supported() -> bool:
    global _SINGLE_BUFFER_OK
    if _SINGLE_BUFFER_OK is None:
        try:
            pl.BlockSpec((8, 128), lambda i: (0, 0), pipeline_mode=pl.Buffered(1))
            _SINGLE_BUFFER_OK = True
        except Exception as e:  # API not available in this jax build
            warnings.warn(f"pl.Buffered(1) unavailable; using default double "
                          f"buffering for weights: {e!r}")
            _SINGLE_BUFFER_OK = False
    return _SINGLE_BUFFER_OK


def _disable_single_buffering(reason: str) -> None:
    global _SINGLE_BUFFER_OK
    if _SINGLE_BUFFER_OK:
        warnings.warn("Single-buffered weight BlockSpecs rejected at compile "
                      f"time; falling back to double buffering: {reason}")
    _SINGLE_BUFFER_OK = False


# ------------------------------- the kernel ---------------------------------

def mlp_kernel(x_ref, w1_ref, b1_ref, w2_ref, b2_ref, w3_ref, b3_ref, o_ref):
    """Fused Linear->ReLU->Linear->ReLU->Linear on one (bm, Hp) batch tile."""
    cdt = w1_ref.dtype  # matmul operand dtype (bf16 by default)
    h = jnp.dot(x_ref[...], w1_ref[...], preferred_element_type=jnp.float32)
    # bias + ReLU in f32, downcast fused into the activation (one live copy).
    h = jnp.maximum(h + b1_ref[...], 0.0).astype(cdt)
    # (Dropout: identity in eval mode)
    h = jnp.dot(h, w2_ref[...], preferred_element_type=jnp.float32)
    h = jnp.maximum(h + b2_ref[...], 0.0).astype(cdt)
    # (Dropout: identity in eval mode)
    o = jnp.dot(h, w3_ref[...], preferred_element_type=jnp.float32)
    o_ref[...] = (o + b3_ref[...]).astype(o_ref.dtype)


@functools.lru_cache(maxsize=None)
def _get_mlp_call(Np, Dp, Hp, bm, cdt_name, out_dt_name, vmem_limit,
                  single_buffer_weights):
    cdt = jnp.dtype(cdt_name)
    out_dtype = jnp.dtype(out_dt_name)
    grid = (Np // bm,)

    def const_spec(shape):
        # Weights/biases never change across the batch grid: single-buffer
        # them so VMEM holds only one copy (matters for large H / v7x).
        if single_buffer_weights:
            return pl.BlockSpec(shape, lambda i: (0, 0),
                                pipeline_mode=pl.Buffered(1))
        return pl.BlockSpec(shape, lambda i: (0, 0))

    in_specs = [
        pl.BlockSpec((bm, Dp), lambda i: (i, 0)),   # x tile (double-buffered)
        const_spec((Dp, Hp)),                       # w1
        const_spec((1, Hp)),                        # b1
        const_spec((Hp, Hp)),                       # w2
        const_spec((1, Hp)),                        # b2
        const_spec((Hp, Hp)),                       # w3
        const_spec((1, Hp)),                        # b3
    ]
    out_spec = pl.BlockSpec((bm, Hp), lambda i: (i, 0))

    w_bytes = (Dp * Hp + 2 * Hp * Hp) * cdt.itemsize + 3 * Hp * 4
    act_bytes = Np * Dp * cdt.itemsize + Np * Hp * out_dtype.itemsize
    cost = pl.CostEstimate(
        flops=2 * Np * (Dp * Hp + 2 * Hp * Hp),
        transcendentals=0,
        bytes_accessed=w_bytes + act_bytes,
    )

    return pl.pallas_call(
        mlp_kernel,
        out_shape=jax.ShapeDtypeStruct((Np, Hp), out_dtype),
        grid_spec=pltpu.PrefetchScalarGridSpec(
            num_scalar_prefetch=0,
            grid=grid,
            in_specs=in_specs,
            out_specs=out_spec,
        ),
        compiler_params=pltpu.CompilerParams(
            dimension_semantics=("parallel",),      # batch axis (megacore)
            vmem_limit_bytes=int(vmem_limit),
        ),
        cost_estimate=cost,
    )


# ------------------------------ module wrapper -------------------------------

class PallasMLP:
    """Holds pre-padded/cast weights and cached per-shape jitted forwards."""

    def __init__(self, params, *, bm=256, compute_dtype=jnp.bfloat16,
                 out_dtype=jnp.float32):
        self.compute_dtype = jnp.dtype(compute_dtype)
        self.out_dtype = jnp.dtype(out_dtype)
        self.bm_request = int(bm)

        w1, b1 = params["w1"], params["b1"]
        w2, b2 = params["w2"], params["b2"]
        w3, b3 = params["w3"], params["b3"]
        self.D, self.H = int(w1.shape[0]), int(w1.shape[1])
        self.Dp = _round_up(self.D, 128)
        self.Hp = _round_up(self.H, 128)

        cdt = self.compute_dtype
        # Pad + cast weights ONCE (hoisted out of the per-call hot path).
        self.weights = (
            _pad2(w1, (self.Dp, self.Hp), cdt),
            _pad2(b1, (1, self.Hp), jnp.float32),
            _pad2(w2, (self.Hp, self.Hp), cdt),
            _pad2(b2, (1, self.Hp), jnp.float32),
            _pad2(w3, (self.Hp, self.Hp), cdt),
            _pad2(b3, (1, self.Hp), jnp.float32),
        )
        self._fns = {}  # per-batch-size jitted forward cache

    # -- tiling policy --------------------------------------------------------
    def _choose_batch_tile(self, N, budget):
        bm_req = self.bm_request
        # On big-VMEM parts (v5e/v6e: 128 MiB), larger tiles amortize the
        # ~0.35 us per-grid-step overhead for big batches.
        if N >= 2048 and budget >= 96 * 1024 * 1024:
            bm_req = max(bm_req, 512)
        # Multiple of 16 (bf16 packs sublanes in pairs), clamped to the batch.
        bm = max(16, _round_up(min(bm_req, max(N, 1)), 16))
        nc = _num_tensorcores()
        if nc > 1 and N >= nc * 16 and _cdiv(_round_up(N, 16), bm) < nc:
            # Guarantee >= nc grid steps so every TensorCore gets work (v7x).
            bm = _round_up(_cdiv(N, nc), 16)
        Np = _round_up(N, bm)
        return bm, Np

    def _make_forward(self, N):
        budget = _vmem_budget_bytes()
        bm, Np = self._choose_batch_tile(N, budget)
        Dp, Hp, D, H = self.Dp, self.Hp, self.D, self.H
        cdt, out_dtype = self.compute_dtype, self.out_dtype
        single_buffer = _single_buffer_supported()

        # VMEM need: weights (x1 or x2 buffered), double-buffered x/out tiles,
        # f32 intermediates; clamp to [32 MiB, per-generation budget].
        w_bytes = (Dp * Hp + 2 * Hp * Hp) * cdt.itemsize + 3 * Hp * 4
        io_bytes = 2 * (bm * Dp * cdt.itemsize + bm * Hp * out_dtype.itemsize)
        interm_bytes = 2 * bm * Hp * 4
        need = (1 if single_buffer else 2) * w_bytes + io_bytes + interm_bytes
        vmem_limit = int(min(max(2 * need, 32 * 1024 * 1024), budget))

        call = _get_mlp_call(Np, Dp, Hp, bm, str(cdt), str(out_dtype),
                             vmem_limit, single_buffer)

        def fwd(x, w1p, b1p, w2p, b2p, w3p, b3p):
            # x.float() from the reference, then cast to the matmul dtype.
            xp = jnp.zeros((Np, Dp), cdt).at[:N, :D].set(
                x.astype(jnp.float32).astype(cdt))
            out = call(xp, w1p, b1p, w2p, b2p, w3p, b3p)
            return out[:N, :H]

        return jax.jit(fwd)

    def __call__(self, x):
        N, D = x.shape
        assert D == self.D, f"expected input_dim={self.D}, got {D}"
        fn = self._fns.get(N)
        if fn is None:
            fn = self._make_forward(N)
            self._fns[N] = fn
        try:
            return fn(x, *self.weights)
        except Exception as e:
            # Single-buffered weight specs rejected by this build/backend:
            # fall back once (cached globally), rebuild, retry.
            if _SINGLE_BUFFER_OK:
                _disable_single_buffering(repr(e))
                fn = self._make_forward(N)
                self._fns[N] = fn
                return fn(x, *self.weights)
            raise


def mlp_forward(x, params, *, bm=256, compute_dtype=jnp.bfloat16,
                out_dtype=jnp.float32):
    """One-shot convenience wrapper (prefer PallasMLP for repeated calls)."""
    return PallasMLP(params, bm=bm, compute_dtype=compute_dtype,
                     out_dtype=out_dtype)(x)


# ------------------------------ reference / init -----------------------------

def init_params(key, input_dim, hidden_dim):
    """Deterministic synthetic init (uniform, roughly PyTorch's default)."""
    ks = jax.random.split(key, 6)

    def lin(kw, kb, fan_in, fan_out):
        bound = 1.0 / jnp.sqrt(fan_in)
        w = jax.random.uniform(kw, (fan_in, fan_out), jnp.float32, -bound, bound)
        b = jax.random.uniform(kb, (1, fan_out), jnp.float32, -bound, bound)
        return w, b

    w1, b1 = lin(ks[0], ks[1], input_dim, hidden_dim)
    w2, b2 = lin(ks[2], ks[3], hidden_dim, hidden_dim)
    w3, b3 = lin(ks[4], ks[5], hidden_dim, hidden_dim)
    return {"w1": w1, "b1": b1, "w2": w2, "b2": b2, "w3": w3, "b3": b3}


def mlp_reference(x, p, compute_dtype=jnp.float32):
    """Pure-JAX reference; compute_dtype lets us match the kernel's casts."""
    cdt = jnp.dtype(compute_dtype)

    def lin(h, w, b):
        return jnp.dot(h.astype(cdt), w.astype(cdt),
                       preferred_element_type=jnp.float32) + b.astype(jnp.float32)

    h = jnp.maximum(lin(x.astype(jnp.float32), p["w1"], p["b1"]), 0.0)
    h = jnp.maximum(lin(h, p["w2"], p["b2"]), 0.0)
    return lin(h, p["w3"], p["b3"])


# ----------------------------------- demo ------------------------------------

if __name__ == "__main__":
    key = jax.random.PRNGKey(0)
    k_x, k_p = jax.random.split(key)

    batch, input_dim, hidden_dim = 16, 32, 32
    x = jax.random.normal(k_x, (batch, input_dim), jnp.float32)
    params = init_params(k_p, input_dim, hidden_dim)

    mlp = PallasMLP(params)          # weights padded/cast once here
    out = mlp(x)                     # first call: trace + compile
    out = jax.block_until_ready(mlp(x))  # hot path (cached jitted forward)

    assert out.shape == (batch, hidden_dim)
    assert out.dtype == jnp.float32

    # Cast-matched reference (same bf16 operand rounding, f32 accumulation).
    ref_bf16 = mlp_reference(x, params, compute_dtype=jnp.bfloat16)
    assert jnp.allclose(out, ref_bf16, atol=5e-3, rtol=5e-3), \
        "mismatch vs cast-matched reference"

    # Full-f32 reference (PyTorch numerics); loose tol covers bf16 rounding.
    ref_f32 = mlp_reference(x, params, compute_dtype=jnp.float32)
    assert jnp.allclose(out, ref_f32, atol=1e-1, rtol=1e-1), \
        "mismatch vs f32 reference"

    print("KERNEL_OK")
</pallas_src>

<mosaic_0001>
module attributes {stable_mosaic.version = 11 : i64} {
  func.func @mlp_kernel(%arg0: i32, %arg1: memref<16x128xbf16, #tpu.memory_space<vmem>>, %arg2: memref<128x128xbf16, #tpu.memory_space<vmem>>, %arg3: memref<1x128xf32, #tpu.memory_space<vmem>>, %arg4: memref<128x128xbf16, #tpu.memory_space<vmem>>, %arg5: memref<1x128xf32, #tpu.memory_space<vmem>>, %arg6: memref<128x128xbf16, #tpu.memory_space<vmem>>, %arg7: memref<1x128xf32, #tpu.memory_space<vmem>>, %arg8: memref<16x128xf32, #tpu.memory_space<vmem>>) attributes {dimension_semantics = [#tpu.dimension_semantics<parallel>], iteration_bounds = array<i64: 1>, scalar_prefetch = 0 : i64, scratch_operands = 0 : i64, tpu.core_type = #tpu.core_type<tc>, window_params = [{transform_indices = @transform_0, window_bounds = array<i64: 16, 128>}, {pipeline_mode = #tpu.pipeline_mode<synchronous>, transform_indices = @transform_1, window_bounds = array<i64: 128, 128>}, {pipeline_mode = #tpu.pipeline_mode<synchronous>, transform_indices = @transform_2, window_bounds = array<i64: 1, 128>}, {pipeline_mode = #tpu.pipeline_mode<synchronous>, transform_indices = @transform_3, window_bounds = array<i64: 128, 128>}, {pipeline_mode = #tpu.pipeline_mode<synchronous>, transform_indices = @transform_4, window_bounds = array<i64: 1, 128>}, {pipeline_mode = #tpu.pipeline_mode<synchronous>, transform_indices = @transform_5, window_bounds = array<i64: 128, 128>}, {pipeline_mode = #tpu.pipeline_mode<synchronous>, transform_indices = @transform_6, window_bounds = array<i64: 1, 128>}, {transform_indices = @transform_7, window_bounds = array<i64: 16, 128>}]} {
    %c0 = arith.constant 0 : index
    %c0_0 = arith.constant 0 : index
    %0 = vector.load %arg1[%c0, %c0_0] : memref<16x128xbf16, #tpu.memory_space<vmem>>, vector<16x128xbf16>
    %c0_1 = arith.constant 0 : index
    %c0_2 = arith.constant 0 : index
    %1 = vector.load %arg2[%c0_1, %c0_2] : memref<128x128xbf16, #tpu.memory_space<vmem>>, vector<128x128xbf16>
    %cst = arith.constant dense<0.000000e+00> : vector<16x128xf32>
    %2 = tpu.matmul %0, %1, %cst {dimension_numbers = #tpu.dot_dimension_numbers<[1], [0], [0], [1], [0, 0, 1, 1], [], []>} : vector<16x128xbf16>, vector<128x128xbf16>, vector<16x128xf32> -> vector<16x128xf32>
    %c0_3 = arith.constant 0 : index
    %c0_4 = arith.constant 0 : index
    %3 = vector.load %arg3[%c0_3, %c0_4] : memref<1x128xf32, #tpu.memory_space<vmem>>, vector<1x128xf32>
    %4 = vector.broadcast %3 : vector<1x128xf32> to vector<16x128xf32>
    %5 = arith.addf %2, %4 : vector<16x128xf32>
    %cst_5 = arith.constant 0.000000e+00 : f32
    %6 = vector.broadcast %cst_5 : f32 to vector<16x128xf32>
    %7 = arith.maximumf %5, %6 : vector<16x128xf32>
    %8 = arith.truncf %7 : vector<16x128xf32> to vector<16x128xbf16>
    %c0_6 = arith.constant 0 : index
    %c0_7 = arith.constant 0 : index
    %9 = vector.load %arg4[%c0_6, %c0_7] : memref<128x128xbf16, #tpu.memory_space<vmem>>, vector<128x128xbf16>
    %cst_8 = arith.constant dense<0.000000e+00> : vector<16x128xf32>
    %10 = tpu.matmul %8, %9, %cst_8 {dimension_numbers = #tpu.dot_dimension_numbers<[1], [0], [0], [1], [0, 0, 1, 1], [], []>} : vector<16x128xbf16>, vector<128x128xbf16>, vector<16x128xf32> -> vector<16x128xf32>
    %c0_9 = arith.constant 0 : index
    %c0_10 = arith.constant 0 : index
    %11 = vector.load %arg5[%c0_9, %c0_10] : memref<1x128xf32, #tpu.memory_space<vmem>>, vector<1x128xf32>
    %12 = vector.broadcast %11 : vector<1x128xf32> to vector<16x128xf32>
    %13 = arith.addf %10, %12 : vector<16x128xf32>
    %cst_11 = arith.constant 0.000000e+00 : f32
    %14 = vector.broadcast %cst_11 : f32 to vector<16x128xf32>
    %15 = arith.maximumf %13, %14 : vector<16x128xf32>
    %16 = arith.truncf %15 : vector<16x128xf32> to vector<16x128xbf16>
    %c0_12 = arith.constant 0 : index
    %c0_13 = arith.constant 0 : index
    %17 = vector.load %arg6[%c0_12, %c0_13] : memref<128x128xbf16, #tpu.memory_space<vmem>>, vector<128x128xbf16>
    %cst_14 = arith.constant dense<0.000000e+00> : vector<16x128xf32>
    %18 = tpu.matmul %16, %17, %cst_14 {dimension_numbers = #tpu.dot_dimension_numbers<[1], [0], [0], [1], [0, 0, 1, 1], [], []>} : vector<16x128xbf16>, vector<128x128xbf16>, vector<16x128xf32> -> vector<16x128xf32>
    %c0_15 = arith.constant 0 : index
    %c0_16 = arith.constant 0 : index
    %19 = vector.load %arg7[%c0_15, %c0_16] : memref<1x128xf32, #tpu.memory_space<vmem>>, vector<1x128xf32>
    %20 = vector.broadcast %19 : vector<1x128xf32> to vector<16x128xf32>
    %21 = arith.addf %18, %20 : vector<16x128xf32>
    %c0_17 = arith.constant 0 : index
    %c0_18 = arith.constant 0 : index
    %22 = vector.load %arg8[%c0_17, %c0_18] : memref<16x128xf32, #tpu.memory_space<vmem>>, vector<16x128xf32>
    tpu.vector_store %arg8[%c0_17, %c0_18], %21 {strides = array<i32>} : memref<16x128xf32, #tpu.memory_space<vmem>>, vector<16x128xf32>,
    return
  }
  func.func @transform_0(%arg0: i32) -> (i32, i32) {
    %c0_i32 = arith.constant 0 : i32
    %c0_i32_0 = arith.constant 0 : i32
    return %arg0, %c0_i32 : i32, i32
  }
  func.func @transform_1(%arg0: i32) -> (i32, i32) {
    %c0_i32 = arith.constant 0 : i32
    %c0_i32_0 = arith.constant 0 : i32
    %c0_i32_1 = arith.constant 0 : i32
    return %c0_i32, %c0_i32_0 : i32, i32
  }
  func.func @transform_2(%arg0: i32) -> (i32, i32) {
    %c0_i32 = arith.constant 0 : i32
    %c0_i32_0 = arith.constant 0 : i32
    %c0_i32_1 = arith.constant 0 : i32
    return %c0_i32, %c0_i32_0 : i32, i32
  }
  func.func @transform_3(%arg0: i32) -> (i32, i32) {
    %c0_i32 = arith.constant 0 : i32
    %c0_i32_0 = arith.constant 0 : i32
    %c0_i32_1 = arith.constant 0 : i32
    return %c0_i32, %c0_i32_0 : i32, i32
  }
  func.func @transform_4(%arg0: i32) -> (i32, i32) {
    %c0_i32 = arith.constant 0 : i32
    %c0_i32_0 = arith.constant 0 : i32
    %c0_i32_1 = arith.constant 0 : i32
    return %c0_i32, %c0_i32_0 : i32, i32
  }
  func.func @transform_5(%arg0: i32) -> (i32, i32) {
    %c0_i32 = arith.constant 0 : i32
    %c0_i32_0 = arith.constant 0 : i32
    %c0_i32_1 = arith.constant 0 : i32
    return %c0_i32, %c0_i32_0 : i32, i32
  }
  func.func @transform_6(%arg0: i32) -> (i32, i32) {
    %c0_i32 = arith.constant 0 : i32
    %c0_i32_0 = arith.constant 0 : i32
    %c0_i32_1 = arith.constant 0 : i32
    return %c0_i32, %c0_i32_0 : i32, i32
  }
  func.func @transform_7(%arg0: i32) -> (i32, i32) {
    %c0_i32 = arith.constant 0 : i32
    %c0_i32_0 = arith.constant 0 : i32
    return %arg0, %c0_i32 : i32, i32
  }
}

module attributes {stable_mosaic.version = 11 : i64} {
  func.func @mlp_kernel(%arg0: i32, %arg1: memref<16x128xbf16, #tpu.memory_space<vmem>>, %arg2: memref<128x128xbf16, #tpu.memory_space<vmem>>, %arg3: memref<1x128xf32, #tpu.memory_space<vmem>>, %arg4: memref<128x128xbf16, #tpu.memory_space<vmem>>, %arg5: memref<1x128xf32, #tpu.memory_space<vmem>>, %arg6: memref<128x128xbf16, #tpu.memory_space<vmem>>, %arg7: memref<1x128xf32, #tpu.memory_space<vmem>>, %arg8: memref<16x128xf32, #tpu.memory_space<vmem>>) attributes {dimension_semantics = [#tpu.dimension_semantics<parallel>], iteration_bounds = array<i64: 1>, scalar_prefetch = 0 : i64, scratch_operands = 0 : i64, tpu.core_type = #tpu.core_type<tc>, window_params = [{transform_indices = @transform_0, window_bounds = array<i64: 16, 128>}, {pipeline_mode = #tpu.pipeline_mode<synchronous>, transform_indices = @transform_1, window_bounds = array<i64: 128, 128>}, {pipeline_mode = #tpu.pipeline_mode<synchronous>, transform_indices = @transform_2, window_bounds = array<i64: 1, 128>}, {pipeline_mode = #tpu.pipeline_mode<synchronous>, transform_indices = @transform_3, window_bounds = array<i64: 128, 128>}, {pipeline_mode = #tpu.pipeline_mode<synchronous>, transform_indices = @transform_4, window_bounds = array<i64: 1, 128>}, {pipeline_mode = #tpu.pipeline_mode<synchronous>, transform_indices = @transform_5, window_bounds = array<i64: 128, 128>}, {pipeline_mode = #tpu.pipeline_mode<synchronous>, transform_indices = @transform_6, window_bounds = array<i64: 1, 128>}, {transform_indices = @transform_7, window_bounds = array<i64: 16, 128>}]} {
    %c0 = arith.constant 0 : index
    %c0_0 = arith.constant 0 : index
    %0 = vector.load %arg1[%c0, %c0_0] : memref<16x128xbf16, #tpu.memory_space<vmem>>, vector<16x128xbf16>
    %c0_1 = arith.constant 0 : index
    %c0_2 = arith.constant 0 : index
    %1 = vector.load %arg2[%c0_1, %c0_2] : memref<128x128xbf16, #tpu.memory_space<vmem>>, vector<128x128xbf16>
    %cst = arith.constant dense<0.000000e+00> : vector<16x128xf32>
    %2 = tpu.matmul %0, %1, %cst {dimension_numbers = #tpu.dot_dimension_numbers<[1], [0], [0], [1], [0, 0, 1, 1], [], []>} : vector<16x128xbf16>, vector<128x128xbf16>, vector<16x128xf32> -> vector<16x128xf32>
    %c0_3 = arith.constant 0 : index
    %c0_4 = arith.constant 0 : index
    %3 = vector.load %arg3[%c0_3, %c0_4] : memref<1x128xf32, #tpu.memory_space<vmem>>, vector<1x128xf32>
    %4 = vector.broadcast %3 : vector<1x128xf32> to vector<16x128xf32>
    %5 = arith.addf %2, %4 : vector<16x128xf32>
    %cst_5 = arith.constant 0.000000e+00 : f32
    %6 = vector.broadcast %cst_5 : f32 to vector<16x128xf32>
    %7 = arith.maximumf %5, %6 : vector<16x128xf32>
    %8 = arith.truncf %7 : vector<16x128xf32> to vector<16x128xbf16>
    %c0_6 = arith.constant 0 : index
    %c0_7 = arith.constant 0 : index
    %9 = vector.load %arg4[%c0_6, %c0_7] : memref<128x128xbf16, #tpu.memory_space<vmem>>, vector<128x128xbf16>
    %cst_8 = arith.constant dense<0.000000e+00> : vector<16x128xf32>
    %10 = tpu.matmul %8, %9, %cst_8 {dimension_numbers = #tpu.dot_dimension_numbers<[1], [0], [0], [1], [0, 0, 1, 1], [], []>} : vector<16x128xbf16>, vector<128x128xbf16>, vector<16x128xf32> -> vector<16x128xf32>
    %c0_9 = arith.constant 0 : index
    %c0_10 = arith.constant 0 : index
    %11 = vector.load %arg5[%c0_9, %c0_10] : memref<1x128xf32, #tpu.memory_space<vmem>>, vector<1x128xf32>
    %12 = vector.broadcast %11 : vector<1x128xf32> to vector<16x128xf32>
    %13 = arith.addf %10, %12 : vector<16x128xf32>
    %cst_11 = arith.constant 0.000000e+00 : f32
    %14 = vector.broadcast %cst_11 : f32 to vector<16x128xf32>
    %15 = arith.maximumf %13, %14 : vector<16x128xf32>
    %16 = arith.truncf %15 : vector<16x128xf32> to vector<16x128xbf16>
    %c0_12 = arith.constant 0 : index
    %c0_13 = arith.constant 0 : index
    %17 = vector.load %arg6[%c0_12, %c0_13] : memref<128x128xbf16, #tpu.memory_space<vmem>>, vector<128x128xbf16>
    %cst_14 = arith.constant dense<0.000000e+00> : vector<16x128xf32>
    %18 = tpu.matmul %16, %17, %cst_14 {dimension_numbers = #tpu.dot_dimension_numbers<[1], [0], [0], [1], [0, 0, 1, 1], [], []>} : vector<16x128xbf16>, vector<128x128xbf16>, vector<16x128xf32> -> vector<16x128xf32>
    %c0_15 = arith.constant 0 : index
    %c0_16 = arith.constant 0 : index
    %19 = vector.load %arg7[%c0_15, %c0_16] : memref<1x128xf32, #tpu.memory_space<vmem>>, vector<1x128xf32>
    %20 = vector.broadcast %19 : vector<1x128xf32> to vector<16x128xf32>
    %21 = arith.addf %18, %20 : vector<16x128xf32>
    %c0_17 = arith.constant 0 : index
    %c0_18 = arith.constant 0 : index
    %22 = vector.load %arg8[%c0_17, %c0_18] : memref<16x128xf32, #tpu.memory_space<vmem>>, vector<16x128xf32>
    tpu.vector_store %arg8[%c0_17, %c0_18], %21 {strides = array<i32>} : memref<16x128xf32, #tpu.memory_space<vmem>>, vector<16x128xf32>,
    return
  }
  func.func @transform_0(%arg0: i32) -> (i32, i32) {
    %c0_i32 = arith.constant 0 : i32
    %c0_i32_0 = arith.constant 0 : i32
    return %arg0, %c0_i32 : i32, i32
  }
  func.func @transform_1(%arg0: i32) -> (i32, i32) {
    %c0_i32 = arith.constant 0 : i32
    %c0_i32_0 = arith.constant 0 : i32
    %c0_i32_1 = arith.constant 0 : i32
    return %c0_i32, %c0_i32_0 : i32, i32
  }
  func.func @transform_2(%arg0: i32) -> (i32, i32) {
    %c0_i32 = arith.constant 0 : i32
    %c0_i32_0 = arith.constant 0 : i32
    %c0_i32_1 = arith.constant 0 : i32
    return %c0_i32, %c0_i32_0 : i32, i32
  }
  func.func @transform_3(%arg0: i32) -> (i32, i32) {
    %c0_i32 = arith.constant 0 : i32
    %c0_i32_0 = arith.constant 0 : i32
    %c0_i32_1 = arith.constant 0 : i32
    return %c0_i32, %c0_i32_0 : i32, i32
  }
  func.func @transform_4(%arg0: i32) -> (i32, i32) {
    %c0_i32 = arith.constant 0 : i32
    %c0_i32_0 = arith.constant 0 : i32
    %c0_i32_1 = arith.constant 0 : i32
    return %c0_i32, %c0_i32_0 : i32, i32
  }
  func.func @transform_5(%arg0: i32) -> (i32, i32) {
    %c0_i32 = arith.constant 0 : i32
    %c0_i32_0 = arith.constant 0 : i32
    %c0_i32_1 = arith.constant 0 : i32
    return %c0_i32, %c0_i32_0 : i32, i32
  }
  func.func @transform_6(%arg0: i32) -> (i32, i32) {
    %c0_i32 = arith.constant 0 : i32
    %c0_i32_0 = arith.constant 0 : i32
    %c0_i32_1 = arith.constant 0 : i32
    return %c0_i32, %c0_i32_0 : i32, i32
  }
  func.func @transform_7(%arg0: i32) -> (i32, i32) {
    %c0_i32 = arith.constant 0 : i32
    %c0_i32_0 = arith.constant 0 : i32
    return %arg0, %c0_i32 : i32, i32
  }
}

</mosaic_0001>

<llo_original>
// kernel: fwd.1
$region0: #{fwd.1}
  #allocation0 [shape = 'u32[]', space=smem, size = 0x4, offset = 0x4, fixed_abs, tag = 'smem constant byte address 0x4 - core index']
  #allocation1 [shape = 'u32[144,128]{1,0:T(1,128)}', space=vmem, size = 0x12000, scoped, tag = 'internal scratch']
  %s0 = inlined_call_operand.vmem [shape: bf16[16,128], index: 0, kind: input, shape index: {}]
  %s1 = inlined_call_operand.hbm [shape: bf16[128,128], index: 1, kind: input, shape index: {}]
  %s2 = inlined_call_operand.vmem [shape: f32[1,128], index: 2, kind: input, shape index: {}]
  %s3 = inlined_call_operand.hbm [shape: bf16[128,128], index: 3, kind: input, shape index: {}]
  %s4 = inlined_call_operand.vmem [shape: f32[1,128], index: 4, kind: input, shape index: {}]
  %s5 = inlined_call_operand.hbm [shape: bf16[128,128], index: 5, kind: input, shape index: {}]
  %s6 = inlined_call_operand.vmem [shape: f32[1,128], index: 6, kind: input, shape index: {}]
  %s7 = inlined_call_operand.hbm [shape: f32[16,128], index: 7, kind: output, shape index: {}]
  %s8 = sld [smem:[#allocation0]]
  $region50: #{fwd.1} parent=0
    _
  %s10 = ssub.s32 1, %s8
  %s11 = scalar_select 0, %s10, %s8
  $region1: #{fwd.1} parent=0
    #allocation2 [shape = 'u8[32768]{0}', space=vmem, size = 0x8000, scoped, tag = 'input window, operand 1, single buffered']
    #allocation3 [shape = 's32[1]{0}', space=sflag, size = 0x4, scoped, tag = 'scoped memory for fwd.1']
    #allocation4 [shape = 's32[1]{0}', space=sflag, size = 0x4, scoped, tag = 'scoped memory for fwd.1']
    #allocation5 [shape = 'u8[32768]{0}', space=vmem, size = 0x8000, scoped, tag = 'input window, operand 3, single buffered']
    #allocation6 [shape = 's32[1]{0}', space=sflag, size = 0x4, scoped, tag = 'scoped memory for fwd.1']
    #allocation7 [shape = 'u8[32768]{0}', space=vmem, size = 0x8000, scoped, tag = 'input window, operand 5, single buffered']
    #allocation8 [shape = 'u8[8192]{0}', space=vmem, size = 0x2000, scoped, tag = 'output window, operand 0, single buffered']
    %12 = vsyncpa [#allocation3], 0
    %13 = vsyncpa [#allocation6], 0
    %14 = vsyncpa [#allocation4], 0
    // Predicated region
    $region2: #{fwd.1} parent=1 // pred_check
      _
    $region3: #{fwd.1} parent=1 // pred_check_branch
      %16 = sbr.rel (0) target = $region5
    $region4: #{fwd.1} parent=1 // pred_region
      _
    $region5: #{fwd.1} parent=1 // pred_fallthru
      _
    // Predicated region
    $region6: #{fwd.1} parent=1 // pred_check
      _
    $region7: #{fwd.1} parent=1 // pred_check_branch
      %18 = sbr.rel (0) target = $region9
    $region8: #{fwd.1} parent=1 // pred_region
      %s20 = ssub.s32 1024, 1024
      %21 = vsyncadd [#allocation3], %s20
      %s22 = sshll.u32 [#allocation2], 4
      %s23 = int_to_ptr.vmem [resolvable:$true] %s22
      %28 = dma.hbm_to_vmem [thread:$0]  %s1, 1024, %s23, [#allocation3], 64, 64, 4
    $region9: #{fwd.1} parent=1 // pred_fallthru
      _
    // Predicated region
    $region10: #{fwd.1} parent=1 // pred_check
      _
    $region11: #{fwd.1} parent=1 // pred_check_branch
      %30 = sbr.rel (0) target = $region13
    $region12: #{fwd.1} parent=1 // pred_region
      _
    $region13: #{fwd.1} parent=1 // pred_fallthru
      _
    // Predicated region
    $region14: #{fwd.1} parent=1 // pred_check
      _
    $region15: #{fwd.1} parent=1 // pred_check_branch
      %32 = sbr.rel (0) target = $region17
    $region16: #{fwd.1} parent=1 // pred_region
      %s34 = ssub.s32 1024, 1024
      %35 = vsyncadd [#allocation6], %s34
      %s36 = sshll.u32 [#allocation5], 4
      %s37 = int_to_ptr.vmem [resolvable:$true] %s36
      %42 = dma.hbm_to_vmem [thread:$0]  %s3, 1024, %s37, [#allocation6], 64, 64, 4
    $region17: #{fwd.1} parent=1 // pred_fallthru
      _
    // Predicated region
    $region18: #{fwd.1} parent=1 // pred_check
      _
    $region19: #{fwd.1} parent=1 // pred_check_branch
      %44 = sbr.rel (0) target = $region21
    $region20: #{fwd.1} parent=1 // pred_region
      _
    $region21: #{fwd.1} parent=1 // pred_fallthru
      _
    // Predicated region
    $region22: #{fwd.1} parent=1 // pred_check
      _
    $region23: #{fwd.1} parent=1 // pred_check_branch
      %46 = sbr.rel (0) target = $region25
    $region24: #{fwd.1} parent=1 // pred_region
      %s48 = ssub.s32 1024, 1024
      %49 = vsyncadd [#allocation6], %s48
      %s50 = sshll.u32 [#allocation7], 4
      %s51 = int_to_ptr.vmem [resolvable:$true] %s50
      %56 = dma.hbm_to_vmem [thread:$0]  %s5, 1024, %s51, [#allocation6], 64, 64, 4
    $region25: #{fwd.1} parent=1 // pred_fallthru
      _
    // Predicated region
    $region26: #{fwd.1} parent=1 // pred_check
      _
    $region27: #{fwd.1} parent=1 // pred_check_branch
      %58 = sbr.rel (0) target = $region29
    $region28: #{fwd.1} parent=1 // pred_region
      _
    $region29: #{fwd.1} parent=1 // pred_fallthru
      _
    // Predicated region
    $region30: #{fwd.1} parent=1 // pred_check
      _
    $region31: #{fwd.1} parent=1 // pred_check_branch
      %60 = sbr.rel (0) target = $region33
    $region32: #{fwd.1} parent=1 // pred_region
      %61 = dma.done [#allocation3], 1024
    $region33: #{fwd.1} parent=1 // pred_fallthru
      _
    // Predicated region
    $region34: #{fwd.1} parent=1 // pred_check
      _
    $region35: #{fwd.1} parent=1 // pred_check_branch
      %63 = sbr.rel (0) target = $region37
    $region36: #{fwd.1} parent=1 // pred_region
      %64 = dma.done [#allocation6], 1024
    $region37: #{fwd.1} parent=1 // pred_fallthru
      _
    // Predicated region
    $region38: #{fwd.1} parent=1 // pred_check
      _
    $region39: #{fwd.1} parent=1 // pred_check_branch
      %66 = sbr.rel (0) target = $region41
    $region40: #{fwd.1} parent=1 // pred_region
      %67 = dma.done [#allocation6], 1024
    $region41: #{fwd.1} parent=1 // pred_fallthru
      _
    %v69 = vld [vmem:[%s0] sm:$0xf]
    %v70 = vld [vmem:[%s0 + $0x4] sm:$0xf]
    %v71 = vld [vmem:[#allocation2] sm:$0xf]
    %v72 = vld [vmem:[#allocation2 + $0x4] sm:$0xf]
    %v73 = vld [vmem:[#allocation2 + $0x8] sm:$0xf]
    %v74 = vld [vmem:[#allocation2 + $0xc] sm:$0xf]
    %v75 = vld [vmem:[#allocation2 + $0x10] sm:$0xf]
    %v76 = vld [vmem:[#allocation2 + $0x14] sm:$0xf]
    %v77 = vld [vmem:[#allocation2 + $0x18] sm:$0xf]
    %v78 = vld [vmem:[#allocation2 + $0x1c] sm:$0xf]
    %v79 = vld [vmem:[#allocation2 + $0x20] sm:$0xf]
    %v80 = vld [vmem:[#allocation2 + $0x24] sm:$0xf]
    %v81 = vld [vmem:[#allocation2 + $0x28] sm:$0xf]
    %v82 = vld [vmem:[#allocation2 + $0x2c] sm:$0xf]
    %v83 = vld [vmem:[#allocation2 + $0x30] sm:$0xf]
    %v84 = vld [vmem:[#allocation2 + $0x34] sm:$0xf]
    %v85 = vld [vmem:[#allocation2 + $0x38] sm:$0xf]
    %v86 = vld [vmem:[#allocation2 + $0x3c] sm:$0xf]
    %v87 = vld [vmem:[%s2] sm:$0x1]
    %v89 = vlaneseq
    %v90 = vshrl.u32 %v89, 7
    %v91 = vsub.s32 0, %v90
    %v92 = vrot.slane %v87, %v91
    %v96 = vunpack.c.l.b16 %v69
    %v97 = vunpack.c.l.b16 %v70
    %v98 = vpack.c.b16 %v97, %v96
    %v116 = vunpack.c.l.b16 %v71
    %v117 = vunpack.c.l.b16 %v72
    %v118 = vunpack.c.l.b16 %v73
    %v119 = vunpack.c.l.b16 %v74
    %v120 = vunpack.c.l.b16 %v75
    %v121 = vunpack.c.l.b16 %v76
    %v122 = vunpack.c.l.b16 %v77
    %v123 = vunpack.c.l.b16 %v78
    %v124 = vunpack.c.l.b16 %v79
    %v125 = vunpack.c.l.b16 %v80
    %v126 = vunpack.c.l.b16 %v81
    %v127 = vunpack.c.l.b16 %v82
    %v128 = vunpack.c.l.b16 %v83
    %v129 = vunpack.c.l.b16 %v84
    %v130 = vunpack.c.l.b16 %v85
    %v131 = vunpack.c.l.b16 %v86
    %v132 = vpack.c.b16 %v117, %v116
    %v133 = vpack.c.b16 %v119, %v118
    %v134 = vpack.c.b16 %v121, %v120
    %v135 = vpack.c.b16 %v123, %v122
    %v136 = vpack.c.b16 %v125, %v124
    %v137 = vpack.c.b16 %v127, %v126
    %v138 = vpack.c.b16 %v129, %v128
    %v139 = vpack.c.b16 %v131, %v130
    %148 = vmatprep.subr.bf16.mxu0 0
    %149 = vmatpush1.bf16.msra.mxu0 %v139
    %150 = vmatprep.subr.bf16.mxu0 0
    %151 = vmatpush1.bf16.msra.mxu0 %v138
    %152 = vmatprep.subr.bf16.mxu0 0
    %153 = vmatpush1.bf16.msra.mxu0 %v137
    %154 = vmatprep.subr.bf16.mxu0 0
    %155 = vmatpush1.bf16.msra.mxu0 %v136
    %156 = vmatprep.subr.bf16.mxu0 0
    %157 = vmatpush1.bf16.msra.mxu0 %v135
    %158 = vmatprep.subr.bf16.mxu0 0
    %159 = vmatpush1.bf16.msra.mxu0 %v134
    %160 = vmatprep.subr.bf16.mxu0 0
    %161 = vmatpush1.bf16.msra.mxu0 %v133
    %162 = vmatprep.subr.bf16.mxu0 0
    %163 = vmatpush1.bf16.msra.mxu0 %v132
    %164 = vmatprep.subr.bf16.mxu0 0
    %165 = vmatpush2.bf16.msra.mxu0 0
    %166 = vmatprep.subr.bf16.mxu0 0
    %167 = vmatpush2.bf16.msra.mxu0 0
    %168 = vmatprep.subr.bf16.mxu0 0
    %169 = vmatpush2.bf16.msra.mxu0 0
    %170 = vmatprep.subr.bf16.mxu0 0
    %171 = vmatpush2.bf16.msra.mxu0 0
    %172 = vmatprep.subr.bf16.mxu0 0
    %173 = vmatpush2.bf16.msra.mxu0 0
    %174 = vmatprep.subr.bf16.mxu0 0
    %175 = vmatpush2.bf16.msra.mxu0 0
    %176 = vmatprep.subr.bf16.mxu0 0
    %177 = vmatpush2.bf16.msra.mxu0 0
    %178 = vmatprep.subr.bf16.mxu0 0
    %179 = vmatpush2.bf16.msra.mxu0 0
    %180 = vmatprep.mubr.bf16.mxu0 0
    %181 = vmatmul.mubr.bf16.gmra.mxu0 %v98
    %v182 = vpop.f32.mrf.mxu0
    %v183 = vadd.f32 %v92, %v182
    %v184 = vpop.f32.mrf.mxu0
    %v185 = vpop.f32.mrf.mxu0
    %v186 = vadd.f32 %v92, %v185
    %v187 = vpop.f32.mrf.mxu0
    %188 = vdwg.mxu0
    %v189 = vmax.f32 %v183, 0.0
    %v190 = vmax.f32 %v186, 0.0
    %v191 = vpack.c.bf16 %v190, %v189
    %v192 = vld [vmem:[#allocation5] sm:$0xf]
    %v193 = vld [vmem:[#allocation5 + $0x4] sm:$0xf]
    %v194 = vld [vmem:[#allocation5 + $0x8] sm:$0xf]
    %v195 = vld [vmem:[#allocation5 + $0xc] sm:$0xf]
    %v196 = vld [vmem:[#allocation5 + $0x10] sm:$0xf]
    %v197 = vld [vmem:[#allocation5 + $0x14] sm:$0xf]
    %v198 = vld [vmem:[#allocation5 + $0x18] sm:$0xf]
    %v199 = vld [vmem:[#allocation5 + $0x1c] sm:$0xf]
    %v200 = vld [vmem:[#allocation5 + $0x20] sm:$0xf]
    %v201 = vld [vmem:[#allocation5 + $0x24] sm:$0xf]
    %v202 = vld [vmem:[#allocation5 + $0x28] sm:$0xf]
    %v203 = vld [vmem:[#allocation5 + $0x2c] sm:$0xf]
    %v204 = vld [vmem:[#allocation5 + $0x30] sm:$0xf]
    %v205 = vld [vmem:[#allocation5 + $0x34] sm:$0xf]
    %v206 = vld [vmem:[#allocation5 + $0x38] sm:$0xf]
    %v207 = vld [vmem:[#allocation5 + $0x3c] sm:$0xf]
    %v208 = vld [vmem:[%s4] sm:$0x1]
    %v210 = vlaneseq
    %v211 = vshrl.u32 %v210, 7
    %v212 = vsub.s32 0, %v211
    %v213 = vrot.slane %v208, %v212
    %v231 = vunpack.c.l.b16 %v192
    %v232 = vunpack.c.l.b16 %v193
    %v233 = vunpack.c.l.b16 %v194
    %v234 = vunpack.c.l.b16 %v195
    %v235 = vunpack.c.l.b16 %v196
    %v236 = vunpack.c.l.b16 %v197
    %v237 = vunpack.c.l.b16 %v198
    %v238 = vunpack.c.l.b16 %v199
    %v239 = vunpack.c.l.b16 %v200
    %v240 = vunpack.c.l.b16 %v201
    %v241 = vunpack.c.l.b16 %v202
    %v242 = vunpack.c.l.b16 %v203
    %v243 = vunpack.c.l.b16 %v204
    %v244 = vunpack.c.l.b16 %v205
    %v245 = vunpack.c.l.b16 %v206
    %v246 = vunpack.c.l.b16 %v207
    %v247 = vpack.c.b16 %v232, %v231
    %v248 = vpack.c.b16 %v234, %v233
    %v249 = vpack.c.b16 %v236, %v235
    %v250 = vpack.c.b16 %v238, %v237
    %v251 = vpack.c.b16 %v240, %v239
    %v252 = vpack.c.b16 %v242, %v241
    %v253 = vpack.c.b16 %v244, %v243
    %v254 = vpack.c.b16 %v246, %v245
    %263 = vmatprep.subr.bf16.mxu0 0
    %264 = vmatpush1.bf16.msra.mxu0 %v254
    %265 = vmatprep.subr.bf16.mxu0 0
    %266 = vmatpush1.bf16.msra.mxu0 %v253
    %267 = vmatprep.subr.bf16.mxu0 0
    %268 = vmatpush1.bf16.msra.mxu0 %v252
    %269 = vmatprep.subr.bf16.mxu0 0
    %270 = vmatpush1.bf16.msra.mxu0 %v251
    %271 = vmatprep.subr.bf16.mxu0 0
    %272 = vmatpush1.bf16.msra.mxu0 %v250
    %273 = vmatprep.subr.bf16.mxu0 0
    %274 = vmatpush1.bf16.msra.mxu0 %v249
    %275 = vmatprep.subr.bf16.mxu0 0
    %276 = vmatpush1.bf16.msra.mxu0 %v248
    %277 = vmatprep.subr.bf16.mxu0 0
    %278 = vmatpush1.bf16.msra.mxu0 %v247
    %279 = vmatprep.subr.bf16.mxu0 0
    %280 = vmatpush2.bf16.msra.mxu0 0
    %281 = vmatprep.subr.bf16.mxu0 0
    %282 = vmatpush2.bf16.msra.mxu0 0
    %283 = vmatprep.subr.bf16.mxu0 0
    %284 = vmatpush2.bf16.msra.mxu0 0
    %285 = vmatprep.subr.bf16.mxu0 0
    %286 = vmatpush2.bf16.msra.mxu0 0
    %287 = vmatprep.subr.bf16.mxu0 0
    %288 = vmatpush2.bf16.msra.mxu0 0
    %289 = vmatprep.subr.bf16.mxu0 0
    %290 = vmatpush2.bf16.msra.mxu0 0
    %291 = vmatprep.subr.bf16.mxu0 0
    %292 = vmatpush2.bf16.msra.mxu0 0
    %293 = vmatprep.subr.bf16.mxu0 0
    %294 = vmatpush2.bf16.msra.mxu0 0
    %295 = vmatprep.mubr.bf16.mxu0 0
    %296 = vmatmul.mubr.bf16.gmra.mxu0 %v191
    %v297 = vpop.f32.mrf.mxu0
    %v298 = vadd.f32 %v213, %v297
    %v299 = vpop.f32.mrf.mxu0
    %v300 = vpop.f32.mrf.mxu0
    %v301 = vadd.f32 %v213, %v300
    %v302 = vpop.f32.mrf.mxu0
    %303 = vdwg.mxu0
    %v304 = vmax.f32 %v298, 0.0
    %v305 = vmax.f32 %v301, 0.0
    %v306 = vpack.c.bf16 %v305, %v304
    %v307 = vld [vmem:[#allocation7] sm:$0xf]
    %v308 = vld [vmem:[#allocation7 + $0x4] sm:$0xf]
    %v309 = vld [vmem:[#allocation7 + $0x8] sm:$0xf]
    %v310 = vld [vmem:[#allocation7 + $0xc] sm:$0xf]
    %v311 = vld [vmem:[#allocation7 + $0x10] sm:$0xf]
    %v312 = vld [vmem:[#allocation7 + $0x14] sm:$0xf]
    %v313 = vld [vmem:[#allocation7 + $0x18] sm:$0xf]
    %v314 = vld [vmem:[#allocation7 + $0x1c] sm:$0xf]
    %v315 = vld [vmem:[#allocation7 + $0x20] sm:$0xf]
    %v316 = vld [vmem:[#allocation7 + $0x24] sm:$0xf]
    %v317 = vld [vmem:[#allocation7 + $0x28] sm:$0xf]
    %v318 = vld [vmem:[#allocation7 + $0x2c] sm:$0xf]
    %v319 = vld [vmem:[#allocation7 + $0x30] sm:$0xf]
    %v320 = vld [vmem:[#allocation7 + $0x34] sm:$0xf]
    %v321 = vld [vmem:[#allocation7 + $0x38] sm:$0xf]
    %v322 = vld [vmem:[#allocation7 + $0x3c] sm:$0xf]
    %v323 = vld [vmem:[%s6] sm:$0x1]
    %v325 = vlaneseq
    %v326 = vshrl.u32 %v325, 7
    %v327 = vsub.s32 0, %v326
    %v328 = vrot.slane %v323, %v327
    %v346 = vunpack.c.l.b16 %v307
    %v347 = vunpack.c.l.b16 %v308
    %v348 = vunpack.c.l.b16 %v309
    %v349 = vunpack.c.l.b16 %v310
    %v350 = vunpack.c.l.b16 %v311
    %v351 = vunpack.c.l.b16 %v312
    %v352 = vunpack.c.l.b16 %v313
    %v353 = vunpack.c.l.b16 %v314
    %v354 = vunpack.c.l.b16 %v315
    %v355 = vunpack.c.l.b16 %v316
    %v356 = vunpack.c.l.b16 %v317
    %v357 = vunpack.c.l.b16 %v318
    %v358 = vunpack.c.l.b16 %v319
    %v359 = vunpack.c.l.b16 %v320
    %v360 = vunpack.c.l.b16 %v321
    %v361 = vunpack.c.l.b16 %v322
    %v362 = vpack.c.b16 %v347, %v346
    %v363 = vpack.c.b16 %v349, %v348
    %v364 = vpack.c.b16 %v351, %v350
    %v365 = vpack.c.b16 %v353, %v352
    %v366 = vpack.c.b16 %v355, %v354
    %v367 = vpack.c.b16 %v357, %v356
    %v368 = vpack.c.b16 %v359, %v358
    %v369 = vpack.c.b16 %v361, %v360
    %378 = vmatprep.subr.bf16.mxu0 0
    %379 = vmatpush1.bf16.msra.mxu0 %v369
    %380 = vmatprep.subr.bf16.mxu0 0
    %381 = vmatpush1.bf16.msra.mxu0 %v368
    %382 = vmatprep.subr.bf16.mxu0 0
    %383 = vmatpush1.bf16.msra.mxu0 %v367
    %384 = vmatprep.subr.bf16.mxu0 0
    %385 = vmatpush1.bf16.msra.mxu0 %v366
    %386 = vmatprep.subr.bf16.mxu0 0
    %387 = vmatpush1.bf16.msra.mxu0 %v365
    %388 = vmatprep.subr.bf16.mxu0 0
    %389 = vmatpush1.bf16.msra.mxu0 %v364
    %390 = vmatprep.subr.bf16.mxu0 0
    %391 = vmatpush1.bf16.msra.mxu0 %v363
    %392 = vmatprep.subr.bf16.mxu0 0
    %393 = vmatpush1.bf16.msra.mxu0 %v362
    %394 = vmatprep.subr.bf16.mxu0 0
    %395 = vmatpush2.bf16.msra.mxu0 0
    %396 = vmatprep.subr.bf16.mxu0 0
    %397 = vmatpush2.bf16.msra.mxu0 0
    %398 = vmatprep.subr.bf16.mxu0 0
    %399 = vmatpush2.bf16.msra.mxu0 0
    %400 = vmatprep.subr.bf16.mxu0 0
    %401 = vmatpush2.bf16.msra.mxu0 0
    %402 = vmatprep.subr.bf16.mxu0 0
    %403 = vmatpush2.bf16.msra.mxu0 0
    %404 = vmatprep.subr.bf16.mxu0 0
    %405 = vmatpush2.bf16.msra.mxu0 0
    %406 = vmatprep.subr.bf16.mxu0 0
    %407 = vmatpush2.bf16.msra.mxu0 0
    %408 = vmatprep.subr.bf16.mxu0 0
    %409 = vmatpush2.bf16.msra.mxu0 0
    %410 = vmatprep.mubr.bf16.mxu0 0
    %411 = vmatmul.mubr.bf16.gmra.mxu0 %v306
    %v412 = vpop.f32.mrf.mxu0
    %v413 = vadd.f32 %v328, %v412
    %v414 = vpop.f32.mrf.mxu0
    %v415 = vpop.f32.mrf.mxu0
    %v416 = vadd.f32 %v328, %v415
    %v417 = vpop.f32.mrf.mxu0
    %418 = vdwg.mxu0
    %419 = vst [vmem:[#allocation8] sm:$0xff] %v413
    %420 = vst [vmem:[#allocation8 + $0x8] sm:$0xff] %v416
    // Predicated region
    $region42: #{fwd.1} parent=1 // pred_check
      _
    $region43: #{fwd.1} parent=1 // pred_check_branch
      %422 = sbr.rel (0) target = $region45
    $region44: #{fwd.1} parent=1 // pred_region
      %s424 = ssub.s32 256, 256
      %425 = vsyncadd [#allocation4], %s424
      %s426 = sshll.u32 [#allocation8], 4
      %s427 = int_to_ptr.vmem [resolvable:$true] %s426
      %432 = dma.vmem_to_hbm [thread:$0]  %s427, 256, %s7, [#allocation4], 128, 128, 8
    $region45: #{fwd.1} parent=1 // pred_fallthru
      _
    // Predicated region
    $region46: #{fwd.1} parent=1 // pred_check
      _
    $region47: #{fwd.1} parent=1 // pred_check_branch
      %434 = sbr.rel (0) target = $region49
    $region48: #{fwd.1} parent=1 // pred_region
      %435 = dma.done [#allocation4], 256
    $region49: #{fwd.1} parent=1 // pred_fallthru
      _
    %436 = vsyncpa [#allocation3], 1
    %437 = vsyncpa [#allocation6], 1
    %438 = vsyncpa [#allocation4], 1

// kernel: fwd.1
$region0: #{fwd.1}
  #allocation0 [shape = 'u32[]', space=smem, size = 0x4, offset = 0x4, fixed_abs, tag = 'smem constant byte address 0x4 - core index']
  #allocation1 [shape = 'u32[144,128]{1,0:T(1,128)}', space=vmem, size = 0x12000, scoped, tag = 'internal scratch']
  %s0 = inlined_call_operand.vmem [shape: bf16[16,128], index: 0, kind: input, shape index: {}]
  %s1 = inlined_call_operand.hbm [shape: bf16[128,128], index: 1, kind: input, shape index: {}]
  %s2 = inlined_call_operand.vmem [shape: f32[1,128], index: 2, kind: input, shape index: {}]
  %s3 = inlined_call_operand.hbm [shape: bf16[128,128], index: 3, kind: input, shape index: {}]
  %s4 = inlined_call_operand.vmem [shape: f32[1,128], index: 4, kind: input, shape index: {}]
  %s5 = inlined_call_operand.hbm [shape: bf16[128,128], index: 5, kind: input, shape index: {}]
  %s6 = inlined_call_operand.vmem [shape: f32[1,128], index: 6, kind: input, shape index: {}]
  %s7 = inlined_call_operand.hbm [shape: f32[16,128], index: 7, kind: output, shape index: {}]
  %s8 = sld [smem:[#allocation0]]
  $region50: #{fwd.1} parent=0
    _
  %s10 = ssub.s32 1, %s8
  %s11 = scalar_select 0, %s10, %s8
  $region1: #{fwd.1} parent=0
    #allocation2 [shape = 'u8[32768]{0}', space=vmem, size = 0x8000, scoped, tag = 'input window, operand 1, single buffered']
    #allocation3 [shape = 's32[1]{0}', space=sflag, size = 0x4, scoped, tag = 'scoped memory for fwd.1']
    #allocation4 [shape = 's32[1]{0}', space=sflag, size = 0x4, scoped, tag = 'scoped memory for fwd.1']
    #allocation5 [shape = 'u8[32768]{0}', space=vmem, size = 0x8000, scoped, tag = 'input window, operand 3, single buffered']
    #allocation6 [shape = 's32[1]{0}', space=sflag, size = 0x4, scoped, tag = 'scoped memory for fwd.1']
    #allocation7 [shape = 'u8[32768]{0}', space=vmem, size = 0x8000, scoped, tag = 'input window, operand 5, single buffered']
    #allocation8 [shape = 'u8[8192]{0}', space=vmem, size = 0x2000, scoped, tag = 'output window, operand 0, single buffered']
    %12 = vsyncpa [#allocation3], 0
    %13 = vsyncpa [#allocation6], 0
    %14 = vsyncpa [#allocation4], 0
    // Predicated region
    $region2: #{fwd.1} parent=1 // pred_check
      _
    $region3: #{fwd.1} parent=1 // pred_check_branch
      %16 = sbr.rel (0) target = $region5
    $region4: #{fwd.1} parent=1 // pred_region
      _
    $region5: #{fwd.1} parent=1 // pred_fallthru
      _
    // Predicated region
    $region6: #{fwd.1} parent=1 // pred_check
      _
    $region7: #{fwd.1} parent=1 // pred_check_branch
      %18 = sbr.rel (0) target = $region9
    $region8: #{fwd.1} parent=1 // pred_region
      %s20 = ssub.s32 1024, 1024
      %21 = vsyncadd [#allocation3], %s20
      %s22 = sshll.u32 [#allocation2], 4
      %s23 = int_to_ptr.vmem [resolvable:$true] %s22
      %28 = dma.hbm_to_vmem [thread:$0]  %s1, 1024, %s23, [#allocation3], 64, 64, 4
    $region9: #{fwd.1} parent=1 // pred_fallthru
      _
    // Predicated region
    $region10: #{fwd.1} parent=1 // pred_check
      _
    $region11: #{fwd.1} parent=1 // pred_check_branch
      %30 = sbr.rel (0) target = $region13
    $region12: #{fwd.1} parent=1 // pred_region
      _
    $region13: #{fwd.1} parent=1 // pred_fallthru
      _
    // Predicated region
    $region14: #{fwd.1} parent=1 // pred_check
      _
    $region15: #{fwd.1} parent=1 // pred_check_branch
      %32 = sbr.rel (0) target = $region17
    $region16: #{fwd.1} parent=1 // pred_region
      %s34 = ssub.s32 1024, 1024
      %35 = vsyncadd [#allocation6], %s34
      %s36 = sshll.u32 [#allocation5], 4
      %s37 = int_to_ptr.vmem [resolvable:$true] %s36
      %42 = dma.hbm_to_vmem [thread:$0]  %s3, 1024, %s37, [#allocation6], 64, 64, 4
    $region17: #{fwd.1} parent=1 // pred_fallthru
      _
    // Predicated region
    $region18: #{fwd.1} parent=1 // pred_check
      _
    $region19: #{fwd.1} parent=1 // pred_check_branch
      %44 = sbr.rel (0) target = $region21
    $region20: #{fwd.1} parent=1 // pred_region
      _
    $region21: #{fwd.1} parent=1 // pred_fallthru
      _
    // Predicated region
    $region22: #{fwd.1} parent=1 // pred_check
      _
    $region23: #{fwd.1} parent=1 // pred_check_branch
      %46 = sbr.rel (0) target = $region25
    $region24: #{fwd.1} parent=1 // pred_region
      %s48 = ssub.s32 1024, 1024
      %49 = vsyncadd [#allocation6], %s48
      %s50 = sshll.u32 [#allocation7], 4
      %s51 = int_to_ptr.vmem [resolvable:$true] %s50
      %56 = dma.hbm_to_vmem [thread:$0]  %s5, 1024, %s51, [#allocation6], 64, 64, 4
    $region25: #{fwd.1} parent=1 // pred_fallthru
      _
    // Predicated region
    $region26: #{fwd.1} parent=1 // pred_check
      _
    $region27: #{fwd.1} parent=1 // pred_check_branch
      %58 = sbr.rel (0) target = $region29
    $region28: #{fwd.1} parent=1 // pred_region
      _
    $region29: #{fwd.1} parent=1 // pred_fallthru
      _
    // Predicated region
    $region30: #{fwd.1} parent=1 // pred_check
      _
    $region31: #{fwd.1} parent=1 // pred_check_branch
      %60 = sbr.rel (0) target = $region33
    $region32: #{fwd.1} parent=1 // pred_region
      %61 = dma.done [#allocation3], 1024
    $region33: #{fwd.1} parent=1 // pred_fallthru
      _
    // Predicated region
    $region34: #{fwd.1} parent=1 // pred_check
      _
    $region35: #{fwd.1} parent=1 // pred_check_branch
      %63 = sbr.rel (0) target = $region37
    $region36: #{fwd.1} parent=1 // pred_region
      %64 = dma.done [#allocation6], 1024
    $region37: #{fwd.1} parent=1 // pred_fallthru
      _
    // Predicated region
    $region38: #{fwd.1} parent=1 // pred_check
      _
    $region39: #{fwd.1} parent=1 // pred_check_branch
      %66 = sbr.rel (0) target = $region41
    $region40: #{fwd.1} parent=1 // pred_region
      %67 = dma.done [#allocation6], 1024
    $region41: #{fwd.1} parent=1 // pred_fallthru
      _
    %v69 = vld [vmem:[%s0] sm:$0xf]
    %v70 = vld [vmem:[%s0 + $0x4] sm:$0xf]
    %v71 = vld [vmem:[#allocation2] sm:$0xf]
    %v72 = vld [vmem:[#allocation2 + $0x4] sm:$0xf]
    %v73 = vld [vmem:[#allocation2 + $0x8] sm:$0xf]
    %v74 = vld [vmem:[#allocation2 + $0xc] sm:$0xf]
    %v75 = vld [vmem:[#allocation2 + $0x10] sm:$0xf]
    %v76 = vld [vmem:[#allocation2 + $0x14] sm:$0xf]
    %v77 = vld [vmem:[#allocation2 + $0x18] sm:$0xf]
    %v78 = vld [vmem:[#allocation2 + $0x1c] sm:$0xf]
    %v79 = vld [vmem:[#allocation2 + $0x20] sm:$0xf]
    %v80 = vld [vmem:[#allocation2 + $0x24] sm:$0xf]
    %v81 = vld [vmem:[#allocation2 + $0x28] sm:$0xf]
    %v82 = vld [vmem:[#allocation2 + $0x2c] sm:$0xf]
    %v83 = vld [vmem:[#allocation2 + $0x30] sm:$0xf]
    %v84 = vld [vmem:[#allocation2 + $0x34] sm:$0xf]
    %v85 = vld [vmem:[#allocation2 + $0x38] sm:$0xf]
    %v86 = vld [vmem:[#allocation2 + $0x3c] sm:$0xf]
    %v87 = vld [vmem:[%s2] sm:$0x1]
    %v89 = vlaneseq
    %v90 = vshrl.u32 %v89, 7
    %v91 = vsub.s32 0, %v90
    %v92 = vrot.slane %v87, %v91
    %v96 = vunpack.c.l.b16 %v69
    %v97 = vunpack.c.l.b16 %v70
    %v98 = vpack.c.b16 %v97, %v96
    %v116 = vunpack.c.l.b16 %v71
    %v117 = vunpack.c.l.b16 %v72
    %v118 = vunpack.c.l.b16 %v73
    %v119 = vunpack.c.l.b16 %v74
    %v120 = vunpack.c.l.b16 %v75
    %v121 = vunpack.c.l.b16 %v76
    %v122 = vunpack.c.l.b16 %v77
    %v123 = vunpack.c.l.b16 %v78
    %v124 = vunpack.c.l.b16 %v79
    %v125 = vunpack.c.l.b16 %v80
    %v126 = vunpack.c.l.b16 %v81
    %v127 = vunpack.c.l.b16 %v82
    %v128 = vunpack.c.l.b16 %v83
    %v129 = vunpack.c.l.b16 %v84
    %v130 = vunpack.c.l.b16 %v85
    %v131 = vunpack.c.l.b16 %v86
    %v132 = vpack.c.b16 %v117, %v116
    %v133 = vpack.c.b16 %v119, %v118
    %v134 = vpack.c.b16 %v121, %v120
    %v135 = vpack.c.b16 %v123, %v122
    %v136 = vpack.c.b16 %v125, %v124
    %v137 = vpack.c.b16 %v127, %v126
    %v138 = vpack.c.b16 %v129, %v128
    %v139 = vpack.c.b16 %v131, %v130
    %148 = vmatprep.subr.bf16.mxu0 0
    %149 = vmatpush1.bf16.msra.mxu0 %v139
    %150 = vmatprep.subr.bf16.mxu0 0
    %151 = vmatpush1.bf16.msra.mxu0 %v138
    %152 = vmatprep.subr.bf16.mxu0 0
    %153 = vmatpush1.bf16.msra.mxu0 %v137
    %154 = vmatprep.subr.bf16.mxu0 0
    %155 = vmatpush1.bf16.msra.mxu0 %v136
    %156 = vmatprep.subr.bf16.mxu0 0
    %157 = vmatpush1.bf16.msra.mxu0 %v135
    %158 = vmatprep.subr.bf16.mxu0 0
    %159 = vmatpush1.bf16.msra.mxu0 %v134
    %160 = vmatprep.subr.bf16.mxu0 0
    %161 = vmatpush1.bf16.msra.mxu0 %v133
    %162 = vmatprep.subr.bf16.mxu0 0
    %163 = vmatpush1.bf16.msra.mxu0 %v132
    %164 = vmatprep.subr.bf16.mxu0 0
    %165 = vmatpush2.bf16.msra.mxu0 0
    %166 = vmatprep.subr.bf16.mxu0 0
    %167 = vmatpush2.bf16.msra.mxu0 0
    %168 = vmatprep.subr.bf16.mxu0 0
    %169 = vmatpush2.bf16.msra.mxu0 0
    %170 = vmatprep.subr.bf16.mxu0 0
    %171 = vmatpush2.bf16.msra.mxu0 0
    %172 = vmatprep.subr.bf16.mxu0 0
    %173 = vmatpush2.bf16.msra.mxu0 0
    %174 = vmatprep.subr.bf16.mxu0 0
    %175 = vmatpush2.bf16.msra.mxu0 0
    %176 = vmatprep.subr.bf16.mxu0 0
    %177 = vmatpush2.bf16.msra.mxu0 0
    %178 = vmatprep.subr.bf16.mxu0 0
    %179 = vmatpush2.bf16.msra.mxu0 0
    %180 = vmatprep.mubr.bf16.mxu0 0
    %181 = vmatmul.mubr.bf16.gmra.mxu0 %v98
    %v182 = vpop.f32.mrf.mxu0
    %v183 = vadd.f32 %v92, %v182
    %v184 = vpop.f32.mrf.mxu0
    %v185 = vpop.f32.mrf.mxu0
    %v186 = vadd.f32 %v92, %v185
    %v187 = vpop.f32.mrf.mxu0
    %188 = vdwg.mxu0
    %v189 = vmax.f32 %v183, 0.0
    %v190 = vmax.f32 %v186, 0.0
    %v191 = vpack.c.bf16 %v190, %v189
    %v192 = vld [vmem:[#allocation5] sm:$0xf]
    %v193 = vld [vmem:[#allocation5 + $0x4] sm:$0xf]
    %v194 = vld [vmem:[#allocation5 + $0x8] sm:$0xf]
    %v195 = vld [vmem:[#allocation5 + $0xc] sm:$0xf]
    %v196 = vld [vmem:[#allocation5 + $0x10] sm:$0xf]
    %v197 = vld [vmem:[#allocation5 + $0x14] sm:$0xf]
    %v198 = vld [vmem:[#allocation5 + $0x18] sm:$0xf]
    %v199 = vld [vmem:[#allocation5 + $0x1c] sm:$0xf]
    %v200 = vld [vmem:[#allocation5 + $0x20] sm:$0xf]
    %v201 = vld [vmem:[#allocation5 + $0x24] sm:$0xf]
    %v202 = vld [vmem:[#allocation5 + $0x28] sm:$0xf]
    %v203 = vld [vmem:[#allocation5 + $0x2c] sm:$0xf]
    %v204 = vld [vmem:[#allocation5 + $0x30] sm:$0xf]
    %v205 = vld [vmem:[#allocation5 + $0x34] sm:$0xf]
    %v206 = vld [vmem:[#allocation5 + $0x38] sm:$0xf]
    %v207 = vld [vmem:[#allocation5 + $0x3c] sm:$0xf]
    %v208 = vld [vmem:[%s4] sm:$0x1]
    %v210 = vlaneseq
    %v211 = vshrl.u32 %v210, 7
    %v212 = vsub.s32 0, %v211
    %v213 = vrot.slane %v208, %v212
    %v231 = vunpack.c.l.b16 %v192
    %v232 = vunpack.c.l.b16 %v193
    %v233 = vunpack.c.l.b16 %v194
    %v234 = vunpack.c.l.b16 %v195
    %v235 = vunpack.c.l.b16 %v196
    %v236 = vunpack.c.l.b16 %v197
    %v237 = vunpack.c.l.b16 %v198
    %v238 = vunpack.c.l.b16 %v199
    %v239 = vunpack.c.l.b16 %v200
    %v240 = vunpack.c.l.b16 %v201
    %v241 = vunpack.c.l.b16 %v202
    %v242 = vunpack.c.l.b16 %v203
    %v243 = vunpack.c.l.b16 %v204
    %v244 = vunpack.c.l.b16 %v205
    %v245 = vunpack.c.l.b16 %v206
    %v246 = vunpack.c.l.b16 %v207
    %v247 = vpack.c.b16 %v232, %v231
    %v248 = vpack.c.b16 %v234, %v233
    %v249 = vpack.c.b16 %v236, %v235
    %v250 = vpack.c.b16 %v238, %v237
    %v251 = vpack.c.b16 %v240, %v239
    %v252 = vpack.c.b16 %v242, %v241
    %v253 = vpack.c.b16 %v244, %v243
    %v254 = vpack.c.b16 %v246, %v245
    %263 = vmatprep.subr.bf16.mxu0 0
    %264 = vmatpush1.bf16.msra.mxu0 %v254
    %265 = vmatprep.subr.bf16.mxu0 0
    %266 = vmatpush1.bf16.msra.mxu0 %v253
    %267 = vmatprep.subr.bf16.mxu0 0
    %268 = vmatpush1.bf16.msra.mxu0 %v252
    %269 = vmatprep.subr.bf16.mxu0 0
    %270 = vmatpush1.bf16.msra.mxu0 %v251
    %271 = vmatprep.subr.bf16.mxu0 0
    %272 = vmatpush1.bf16.msra.mxu0 %v250
    %273 = vmatprep.subr.bf16.mxu0 0
    %274 = vmatpush1.bf16.msra.mxu0 %v249
    %275 = vmatprep.subr.bf16.mxu0 0
    %276 = vmatpush1.bf16.msra.mxu0 %v248
    %277 = vmatprep.subr.bf16.mxu0 0
    %278 = vmatpush1.bf16.msra.mxu0 %v247
    %279 = vmatprep.subr.bf16.mxu0 0
    %280 = vmatpush2.bf16.msra.mxu0 0
    %281 = vmatprep.subr.bf16.mxu0 0
    %282 = vmatpush2.bf16.msra.mxu0 0
    %283 = vmatprep.subr.bf16.mxu0 0
    %284 = vmatpush2.bf16.msra.mxu0 0
    %285 = vmatprep.subr.bf16.mxu0 0
    %286 = vmatpush2.bf16.msra.mxu0 0
    %287 = vmatprep.subr.bf16.mxu0 0
    %288 = vmatpush2.bf16.msra.mxu0 0
    %289 = vmatprep.subr.bf16.mxu0 0
    %290 = vmatpush2.bf16.msra.mxu0 0
    %291 = vmatprep.subr.bf16.mxu0 0
    %292 = vmatpush2.bf16.msra.mxu0 0
    %293 = vmatprep.subr.bf16.mxu0 0
    %294 = vmatpush2.bf16.msra.mxu0 0
    %295 = vmatprep.mubr.bf16.mxu0 0
    %296 = vmatmul.mubr.bf16.gmra.mxu0 %v191
    %v297 = vpop.f32.mrf.mxu0
    %v298 = vadd.f32 %v213, %v297
    %v299 = vpop.f32.mrf.mxu0
    %v300 = vpop.f32.mrf.mxu0
    %v301 = vadd.f32 %v213, %v300
    %v302 = vpop.f32.mrf.mxu0
    %303 = vdwg.mxu0
    %v304 = vmax.f32 %v298, 0.0
    %v305 = vmax.f32 %v301, 0.0
    %v306 = vpack.c.bf16 %v305, %v304
    %v307 = vld [vmem:[#allocation7] sm:$0xf]
    %v308 = vld [vmem:[#allocation7 + $0x4] sm:$0xf]
    %v309 = vld [vmem:[#allocation7 + $0x8] sm:$0xf]
    %v310 = vld [vmem:[#allocation7 + $0xc] sm:$0xf]
    %v311 = vld [vmem:[#allocation7 + $0x10] sm:$0xf]
    %v312 = vld [vmem:[#allocation7 + $0x14] sm:$0xf]
    %v313 = vld [vmem:[#allocation7 + $0x18] sm:$0xf]
    %v314 = vld [vmem:[#allocation7 + $0x1c] sm:$0xf]
    %v315 = vld [vmem:[#allocation7 + $0x20] sm:$0xf]
    %v316 = vld [vmem:[#allocation7 + $0x24] sm:$0xf]
    %v317 = vld [vmem:[#allocation7 + $0x28] sm:$0xf]
    %v318 = vld [vmem:[#allocation7 + $0x2c] sm:$0xf]
    %v319 = vld [vmem:[#allocation7 + $0x30] sm:$0xf]
    %v320 = vld [vmem:[#allocation7 + $0x34] sm:$0xf]
    %v321 = vld [vmem:[#allocation7 + $0x38] sm:$0xf]
    %v322 = vld [vmem:[#allocation7 + $0x3c] sm:$0xf]
    %v323 = vld [vmem:[%s6] sm:$0x1]
    %v325 = vlaneseq
    %v326 = vshrl.u32 %v325, 7
    %v327 = vsub.s32 0, %v326
    %v328 = vrot.slane %v323, %v327
    %v346 = vunpack.c.l.b16 %v307
    %v347 = vunpack.c.l.b16 %v308
    %v348 = vunpack.c.l.b16 %v309
    %v349 = vunpack.c.l.b16 %v310
    %v350 = vunpack.c.l.b16 %v311
    %v351 = vunpack.c.l.b16 %v312
    %v352 = vunpack.c.l.b16 %v313
    %v353 = vunpack.c.l.b16 %v314
    %v354 = vunpack.c.l.b16 %v315
    %v355 = vunpack.c.l.b16 %v316
    %v356 = vunpack.c.l.b16 %v317
    %v357 = vunpack.c.l.b16 %v318
    %v358 = vunpack.c.l.b16 %v319
    %v359 = vunpack.c.l.b16 %v320
    %v360 = vunpack.c.l.b16 %v321
    %v361 = vunpack.c.l.b16 %v322
    %v362 = vpack.c.b16 %v347, %v346
    %v363 = vpack.c.b16 %v349, %v348
    %v364 = vpack.c.b16 %v351, %v350
    %v365 = vpack.c.b16 %v353, %v352
    %v366 = vpack.c.b16 %v355, %v354
    %v367 = vpack.c.b16 %v357, %v356
    %v368 = vpack.c.b16 %v359, %v358
    %v369 = vpack.c.b16 %v361, %v360
    %378 = vmatprep.subr.bf16.mxu0 0
    %379 = vmatpush1.bf16.msra.mxu0 %v369
    %380 = vmatprep.subr.bf16.mxu0 0
    %381 = vmatpush1.bf16.msra.mxu0 %v368
    %382 = vmatprep.subr.bf16.mxu0 0
    %383 = vmatpush1.bf16.msra.mxu0 %v367
    %384 = vmatprep.subr.bf16.mxu0 0
    %385 = vmatpush1.bf16.msra.mxu0 %v366
    %386 = vmatprep.subr.bf16.mxu0 0
    %387 = vmatpush1.bf16.msra.mxu0 %v365
    %388 = vmatprep.subr.bf16.mxu0 0
    %389 = vmatpush1.bf16.msra.mxu0 %v364
    %390 = vmatprep.subr.bf16.mxu0 0
    %391 = vmatpush1.bf16.msra.mxu0 %v363
    %392 = vmatprep.subr.bf16.mxu0 0
    %393 = vmatpush1.bf16.msra.mxu0 %v362
    %394 = vmatprep.subr.bf16.mxu0 0
    %395 = vmatpush2.bf16.msra.mxu0 0
    %396 = vmatprep.subr.bf16.mxu0 0
    %397 = vmatpush2.bf16.msra.mxu0 0
    %398 = vmatprep.subr.bf16.mxu0 0
    %399 = vmatpush2.bf16.msra.mxu0 0
    %400 = vmatprep.subr.bf16.mxu0 0
    %401 = vmatpush2.bf16.msra.mxu0 0
    %402 = vmatprep.subr.bf16.mxu0 0
    %403 = vmatpush2.bf16.msra.mxu0 0
    %404 = vmatprep.subr.bf16.mxu0 0
    %405 = vmatpush2.bf16.msra.mxu0 0
    %406 = vmatprep.subr.bf16.mxu0 0
    %407 = vmatpush2.bf16.msra.mxu0 0
    %408 = vmatprep.subr.bf16.mxu0 0
    %409 = vmatpush2.bf16.msra.mxu0 0
    %410 = vmatprep.mubr.bf16.mxu0 0
    %411 = vmatmul.mubr.bf16.gmra.mxu0 %v306
    %v412 = vpop.f32.mrf.mxu0
    %v413 = vadd.f32 %v328, %v412
    %v414 = vpop.f32.mrf.mxu0
    %v415 = vpop.f32.mrf.mxu0
    %v416 = vadd.f32 %v328, %v415
    %v417 = vpop.f32.mrf.mxu0
    %418 = vdwg.mxu0
    %419 = vst [vmem:[#allocation8] sm:$0xff] %v413
    %420 = vst [vmem:[#allocation8 + $0x8] sm:$0xff] %v416
    // Predicated region
    $region42: #{fwd.1} parent=1 // pred_check
      _
    $region43: #{fwd.1} parent=1 // pred_check_branch
      %422 = sbr.rel (0) target = $region45
    $region44: #{fwd.1} parent=1 // pred_region
      %s424 = ssub.s32 256, 256
      %425 = vsyncadd [#allocation4], %s424
      %s426 = sshll.u32 [#allocation8], 4
      %s427 = int_to_ptr.vmem [resolvable:$true] %s426
      %432 = dma.vmem_to_hbm [thread:$0]  %s427, 256, %s7, [#allocation4], 128, 128, 8
    $region45: #{fwd.1} parent=1 // pred_fallthru
      _
    // Predicated region
    $region46: #{fwd.1} parent=1 // pred_check
      _
    $region47: #{fwd.1} parent=1 // pred_check_branch
      %434 = sbr.rel (0) target = $region49
    $region48: #{fwd.1} parent=1 // pred_region
      %435 = dma.done [#allocation4], 256
    $region49: #{fwd.1} parent=1 // pred_fallthru
      _
    %436 = vsyncpa [#allocation3], 1
    %437 = vsyncpa [#allocation6], 1
    %438 = vsyncpa [#allocation4], 1

</llo_original>
